<compile_context>
chip_gen: v7x
topology: tpu7x:2x2x1
jax: 0.10.0
libtpu: 0.0.40
codegen_flags: <defaults>
</compile_context>

<pallas_src>
import functools

import jax
import jax.numpy as jnp
from jax.experimental import pallas as pl
from jax.experimental.pallas import tpu as pltpu


def _round_up(x, m):
    return (x + m - 1) // m * m


def _focal_loss_kernel(predict_ref, target_ref, alpha_ref, out_ref,
                       *, tile_n, total_n, gamma):
    i = pl.program_id(0)

    logits = predict_ref[...].astype(jnp.float32)   # (tile_n, C)
    tgt = target_ref[...]                           # (tile_n, 1) int32
    alpha_t = alpha_ref[...]                        # (tile_n, 1) f32 (pre-gathered)

    # log-sum-exp formulation: log_p = logit_t - log(sum(exp(logits - max)))
    # (avoids the full (N, C) softmax division and log(0) when the target
    #  probability underflows in f32).
    m = jnp.max(logits, axis=1, keepdims=True)                       # (tile_n, 1)
    shifted = logits - m
    denom = jnp.sum(jnp.exp(shifted), axis=1, keepdims=True)         # (tile_n, 1)
    lse = jnp.log(denom)

    # Target logit via a single select + cross-lane reduce (no one-hot
    # astype + multiply: saves ~2 VALU ops/element, matters on v7x).
    class_ids = jax.lax.broadcasted_iota(jnp.int32, logits.shape, 1)
    logit_t = jnp.sum(jnp.where(class_ids == tgt, shifted, 0.0),
                      axis=1, keepdims=True)                         # (tile_n, 1)
    log_p = logit_t - lse                                            # log softmax @ target
    probs = jnp.exp(log_p)

    d = 1.0 - probs
    if gamma == 2:
        focal = d * d            # explicit square: no pow -> exp(g*log(x)) / NaN at d==0
    else:
        focal = jnp.where(d > 0.0,
                          jnp.power(jnp.maximum(d, 1e-30), gamma),
                          0.0)

    loss = -alpha_t * focal * log_p                                  # (tile_n, 1)

    # Mask rows past the true batch size BEFORE the cross-row sum (padded
    # remainder rows may hold garbage / NaN-producing values).
    row_ids = i * tile_n + jax.lax.broadcasted_iota(jnp.int32, loss.shape, 0)
    loss = jnp.where(row_ids < total_n, loss, 0.0)

    partial = jnp.sum(loss, axis=0, keepdims=True)                   # (1, 1)
    # (8, 128)-aligned lane-dense store of the per-tile partial sum.
    out_ref[...] = jnp.broadcast_to(partial[None], out_ref.shape)    # (1, 8, 128)


def multi_ce_focal_loss(predict, target, alpha=None, gamma=2, reduction="mean",
                        tile_vmem_bytes=8 * 1024 * 1024):
    """predict: (N, C) f32/bf16 logits, target: (N,) int, alpha: (C,) or (C,1)."""
    assert reduction in ("mean", "sum")
    n, c = predict.shape

    if alpha is None:
        alpha = jnp.ones((c,), jnp.float32)        # module default: ones(class_num, 1)

    # Keep bf16 logits in HBM (kernel is bandwidth-bound); upcast in-kernel.
    if predict.dtype not in (jnp.dtype(jnp.float32), jnp.dtype(jnp.bfloat16)):
        predict = predict.astype(jnp.float32)
    align = 8 if predict.dtype == jnp.dtype(jnp.float32) else 16

    # Tile size: the biggest sublane-aligned row count that keeps a single
    # (tile_n, C) logits block at ~tile_vmem_bytes.  No artificial row cap:
    # for small C this is the dominant lever (per-step pipeline overhead is
    # ~0.35 us, so multi-MiB blocks are needed to hit HBM roofline).  The
    # 8 MiB default (16 MiB double-buffered) stays within v7x's 64 MiB/TC.
    itemsize = jnp.dtype(predict.dtype).itemsize
    budget_rows = max(align, (tile_vmem_bytes // (c * itemsize)) // align * align)
    tile_n = int(min(budget_rows, _round_up(n, align)))
    num_tiles = pl.cdiv(n, tile_n)

    target_i32 = target.astype(jnp.int32)
    target_2d = target_i32.reshape(n, 1)
    # alpha = self.alpha[target]: gather per-row OUTSIDE the kernel (cheap (N,)
    # gather in XLA, +4 bytes/row HBM) instead of an in-kernel one-hot reduce.
    alpha_vec = jnp.asarray(alpha, jnp.float32).reshape(-1)
    alpha_t = alpha_vec[target_i32].reshape(n, 1)

    kernel = functools.partial(_focal_loss_kernel,
                               tile_n=tile_n, total_n=n, gamma=gamma)

    cost = pl.CostEstimate(
        flops=8 * n * c,
        transcendentals=n * c + 2 * n,
        bytes_accessed=n * c * itemsize + 8 * n + num_tiles * 8 * 128 * 4,
    )

    partials = pl.pallas_call(
        kernel,
        out_shape=jax.ShapeDtypeStruct((num_tiles, 8, 128), jnp.float32),
        grid=(num_tiles,),
        in_specs=[
            pl.BlockSpec((tile_n, c), lambda i: (i, 0)),   # logits tile
            pl.BlockSpec((tile_n, 1), lambda i: (i, 0)),   # target tile
            pl.BlockSpec((tile_n, 1), lambda i: (i, 0)),   # per-row alpha tile
        ],
        out_specs=pl.BlockSpec((1, 8, 128), lambda i: (i, 0, 0)),
        compiler_params=pltpu.CompilerParams(
            dimension_semantics=("parallel",),             # megacore-shardable on v7x
            vmem_limit_bytes=40 * 1024 * 1024),            # safe on v5e/v6e/v7x
        cost_estimate=cost,
    )(predict, target_2d, alpha_t)

    total = jnp.sum(partials[:, 0, 0])
    if reduction == "mean":
        return total / jnp.float32(n)
    return total


def reference_loss(predict, target, alpha, gamma=2.0):
    pt = jax.nn.softmax(predict.astype(jnp.float32), axis=1)
    mask = jax.nn.one_hot(target, predict.shape[1], dtype=jnp.float32)
    probs = jnp.sum(pt * mask, axis=1, keepdims=True)
    a = alpha[target].reshape(-1, 1)
    loss = -a * jnp.power(1.0 - probs, gamma) * jnp.log(probs)
    return jnp.mean(loss)


if __name__ == "__main__":
    key = jax.random.PRNGKey(0)
    k1, k2 = jax.random.split(key)

    batch = 8
    class_num = 16

    predict = jax.random.normal(k1, (batch, class_num), dtype=jnp.float32)
    target = jax.random.randint(k2, (batch,), 0, class_num, dtype=jnp.int32)
    # Module init: alpha = ones(class_num, 1); deterministic, no checkpoint.
    alpha = jnp.ones((class_num,), dtype=jnp.float32)

    out = multi_ce_focal_loss(predict, target, alpha)
    out = jax.block_until_ready(out)

    ref = reference_loss(predict, target, alpha)
    assert jnp.allclose(out, ref, rtol=1e-5, atol=1e-6), (out, ref)

    print("KERNEL_OK")
</pallas_src>

<mosaic_0001>
module attributes {stable_mosaic.version = 11 : i64} {
  func.func @_focal_loss_kernel(%arg0: i32, %arg1: memref<8x16xf32, #tpu.memory_space<vmem>>, %arg2: memref<8x1xi32, #tpu.memory_space<vmem>>, %arg3: memref<8x1xf32, #tpu.memory_space<vmem>>, %arg4: memref<1x8x128xf32, #tpu.memory_space<vmem>>) attributes {dimension_semantics = [#tpu.dimension_semantics<parallel>], iteration_bounds = array<i64: 1>, scalar_prefetch = 0 : i64, scratch_operands = 0 : i64, tpu.core_type = #tpu.core_type<tc>, window_params = [{transform_indices = @transform_0, window_bounds = array<i64: 8, 16>}, {transform_indices = @transform_1, window_bounds = array<i64: 8, 1>}, {transform_indices = @transform_2, window_bounds = array<i64: 8, 1>}, {transform_indices = @transform_3, window_bounds = array<i64: 1, 8, 128>}]} {
    %c0 = arith.constant 0 : index
    %c0_0 = arith.constant 0 : index
    %0 = vector.load %arg1[%c0, %c0_0] : memref<8x16xf32, #tpu.memory_space<vmem>>, vector<8x16xf32>
    %c0_1 = arith.constant 0 : index
    %c0_2 = arith.constant 0 : index
    %1 = vector.load %arg2[%c0_1, %c0_2] : memref<8x1xi32, #tpu.memory_space<vmem>>, vector<8x1xi32>
    %c0_3 = arith.constant 0 : index
    %c0_4 = arith.constant 0 : index
    %2 = vector.load %arg3[%c0_3, %c0_4] : memref<8x1xf32, #tpu.memory_space<vmem>>, vector<8x1xf32>
    %cst = arith.constant dense<0xFF800000> : vector<8xf32>
    %3 = vector.multi_reduction <maximumf>, %0, %cst [1] : vector<8x16xf32> to vector<8xf32>
    %4 = vector.shape_cast %3 : vector<8xf32> to vector<8x1xf32>
    %5 = vector.broadcast %4 : vector<8x1xf32> to vector<8x16xf32>
    %6 = arith.subf %0, %5 : vector<8x16xf32>
    %7 = math.exp %6 : vector<8x16xf32>
    %cst_5 = arith.constant dense<0.000000e+00> : vector<8xf32>
    %8 = vector.multi_reduction <add>, %7, %cst_5 [1] : vector<8x16xf32> to vector<8xf32>
    %9 = vector.shape_cast %8 : vector<8xf32> to vector<8x1xf32>
    %10 = math.log %9 : vector<8x1xf32>
    %11 = tpu.iota {dimensions = array<i32: 1>} : vector<8x16xi32>
    %12 = vector.broadcast %1 : vector<8x1xi32> to vector<8x16xi32>
    %13 = arith.cmpi eq, %11, %12 : vector<8x16xi32>
    %cst_6 = arith.constant 0.000000e+00 : f32
    %14 = vector.broadcast %cst_6 : f32 to vector<8x16xf32>
    %15 = arith.select %13, %6, %14 : vector<8x16xi1>, vector<8x16xf32>
    %cst_7 = arith.constant dense<0.000000e+00> : vector<8xf32>
    %16 = vector.multi_reduction <add>, %15, %cst_7 [1] : vector<8x16xf32> to vector<8xf32>
    %17 = vector.shape_cast %16 : vector<8xf32> to vector<8x1xf32>
    %18 = arith.subf %17, %10 : vector<8x1xf32>
    %19 = math.exp %18 : vector<8x1xf32>
    %cst_8 = arith.constant 1.000000e+00 : f32
    %20 = vector.broadcast %cst_8 : f32 to vector<8x1xf32>
    %21 = arith.subf %20, %19 : vector<8x1xf32>
    %22 = arith.mulf %21, %21 : vector<8x1xf32>
    %cst_9 = arith.constant 0.000000e+00 : f32
    %23 = vector.broadcast %cst_9 : f32 to vector<8x1xf32>
    %24 = arith.subf %23, %2 : vector<8x1xf32>
    %25 = arith.mulf %24, %22 : vector<8x1xf32>
    %26 = arith.mulf %25, %18 : vector<8x1xf32>
    %c8_i32 = arith.constant 8 : i32
    %27 = arith.muli %arg0, %c8_i32 : i32
    %28 = tpu.iota {dimensions = array<i32: 0>} : vector<8x1xi32>
    %29 = vector.broadcast %27 : i32 to vector<8x1xi32>
    %30 = arith.addi %29, %28 : vector<8x1xi32>
    %c8_i32_10 = arith.constant 8 : i32
    %31 = vector.broadcast %c8_i32_10 : i32 to vector<8x1xi32>
    %32 = arith.cmpi slt, %30, %31 : vector<8x1xi32>
    %cst_11 = arith.constant 0.000000e+00 : f32
    %33 = vector.broadcast %cst_11 : f32 to vector<8x1xf32>
    %34 = arith.select %32, %26, %33 : vector<8x1xi1>, vector<8x1xf32>
    %cst_12 = arith.constant dense<0.000000e+00> : vector<1xf32>
    %35 = vector.multi_reduction <add>, %34, %cst_12 [0] : vector<8x1xf32> to vector<1xf32>
    %36 = vector.shape_cast %35 : vector<1xf32> to vector<1x1xf32>
    %37 = vector.shape_cast %36 : vector<1x1xf32> to vector<1x1x1xf32>
    %38 = vector.shape_cast %37 : vector<1x1x1xf32> to vector<1x1x1xf32>
    %39 = vector.broadcast %38 : vector<1x1x1xf32> to vector<1x8x128xf32>
    %c0_13 = arith.constant 0 : index
    %c0_14 = arith.constant 0 : index
    %c0_15 = arith.constant 0 : index
    %40 = vector.load %arg4[%c0_13, %c0_14, %c0_15] : memref<1x8x128xf32, #tpu.memory_space<vmem>>, vector<1x8x128xf32>
    tpu.vector_store %arg4[%c0_13, %c0_14, %c0_15], %39 {strides = array<i32>} : memref<1x8x128xf32, #tpu.memory_space<vmem>>, vector<1x8x128xf32>,
    return
  }
  func.func @transform_0(%arg0: i32) -> (i32, i32) {
    %c0_i32 = arith.constant 0 : i32
    %c0_i32_0 = arith.constant 0 : i32
    return %arg0, %c0_i32 : i32, i32
  }
  func.func @transform_1(%arg0: i32) -> (i32, i32) {
    %c0_i32 = arith.constant 0 : i32
    %c0_i32_0 = arith.constant 0 : i32
    return %arg0, %c0_i32 : i32, i32
  }
  func.func @transform_2(%arg0: i32) -> (i32, i32) {
    %c0_i32 = arith.constant 0 : i32
    %c0_i32_0 = arith.constant 0 : i32
    return %arg0, %c0_i32 : i32, i32
  }
  func.func @transform_3(%arg0: i32) -> (i32, i32, i32) {
    %c0_i32 = arith.constant 0 : i32
    %c0_i32_0 = arith.constant 0 : i32
    %c0_i32_1 = arith.constant 0 : i32
    return %arg0, %c0_i32, %c0_i32_0 : i32, i32, i32
  }
}

</mosaic_0001>

<llo_original>
// kernel: tpu_custom_call.1
$region0: #{tpu_custom_call.1}
  #allocation0 [shape = 'u32[]', space=smem, size = 0x4, offset = 0x4, fixed_abs, tag = 'smem constant byte address 0x4 - core index']
  #allocation1 [shape = 'u32[144,128]{1,0:T(1,128)}', space=vmem, size = 0x12000, scoped, tag = 'internal scratch']
  %s0 = inlined_call_operand.vmem [shape: f32[8,16], index: 0, kind: input, shape index: {}]
  %s1 = inlined_call_operand.vmem [shape: s32[8,1], index: 1, kind: input, shape index: {}]
  %s2 = inlined_call_operand.vmem [shape: f32[8,1], index: 2, kind: input, shape index: {}]
  %s3 = inlined_call_operand.hbm [shape: f32[1,8,128], index: 3, kind: output, shape index: {}]
  %s4 = sld [smem:[#allocation0]]
  $region22: #{tpu_custom_call.1} parent=0
    _
  %s6 = ssub.s32 1, %s4
  %s7 = scalar_select 0, %s6, %s4
  $region1: #{tpu_custom_call.1} parent=0
    #allocation2 [shape = 'u8[4096]{0}', space=vmem, size = 0x1000, scoped, tag = 'output window, operand 0, single buffered']
    #allocation3 [shape = 's32[1]{0}', space=sflag, size = 0x4, scoped, tag = 'scoped memory for tpu_custom_call.1']
    %8 = vsyncpa [#allocation3], 0
    // Predicated region
    $region2: #{tpu_custom_call.1} parent=1 // pred_check
      _
    $region3: #{tpu_custom_call.1} parent=1 // pred_check_branch
      %10 = sbr.rel (0) target = $region5
    $region4: #{tpu_custom_call.1} parent=1 // pred_region
      _
    $region5: #{tpu_custom_call.1} parent=1 // pred_fallthru
      _
    // Predicated region
    $region6: #{tpu_custom_call.1} parent=1 // pred_check
      _
    $region7: #{tpu_custom_call.1} parent=1 // pred_check_branch
      %12 = sbr.rel (0) target = $region9
    $region8: #{tpu_custom_call.1} parent=1 // pred_region
      _
    $region9: #{tpu_custom_call.1} parent=1 // pred_fallthru
      _
    // Predicated region
    $region10: #{tpu_custom_call.1} parent=1 // pred_check
      _
    $region11: #{tpu_custom_call.1} parent=1 // pred_check_branch
      %14 = sbr.rel (0) target = $region13
    $region12: #{tpu_custom_call.1} parent=1 // pred_region
      _
    $region13: #{tpu_custom_call.1} parent=1 // pred_fallthru
      _
    %v15 = vld [vmem:[%s0] sm:$0xff]
    %v16 = vld [vmem:[%s1] sm:$0xff]
    %v17 = vld [vmem:[%s2] sm:$0xff]
    %vm18 = vcmask 130048
    %v19 = vsel %vm18, %v15, -inf
    %20 = vmax.xlane.f32.xlu0 %v19
    %v21 = vpop.xlane.xlu0 %20
    %v22 = vsub.f32 %v15, %v21
    %v23 = vmul.f32 %v22, 1.442695
    %v24 = vpow.pop %v23
    %v25 = vsel %vm18, %v24, 0.0
    %26 = vadd.xlane.f32.xlu0 %v25
    %v27 = vpop.xlane.xlu0 %26
    %v28 = vlog2.pop %v27
    %v29 = vmul.f32 %v28, 0.6931472
    %v30 = vlaneseq
    %v31 = vand.u32 %v30, 127
    %32 = vset.pattern.permute.xlu0 0
    %33 = vperm.xlu0 %32, %v16
    %v34 = vpop.permute.xlu0 %33
    %vm35 = vcmp.eq.s32.totalorder %v31, %v34
    %v36 = vsel %vm35, %v22, 0.0
    %v37 = vsel %vm18, %v36, 0.0
    %38 = vadd.xlane.f32.xlu0 %v37
    %v39 = vpop.xlane.xlu0 %38
    %v40 = vsub.f32 %v39, %v29
    %v41 = vmul.f32 %v40, 1.442695
    %v42 = vpow.pop %v41
    %v43 = vsub.f32 1.0, %v42
    %v44 = vmul.f32 %v43, %v43
    %v45 = vsub.f32 0.0, %v17
    %v46 = vmul.f32 %v45, %v44
    %v47 = vmul.f32 %v46, %v40
    %s48 = smul.u32 0, 8
    %v49 = vlaneseq
    %v50 = vshrl.u32 %v49, 7
    %v51 = vstv %s48
    %v52 = vadd.s32 %v51, %v50
    %vm53 = vcmp.lt.s32.totalorder %v52, 8
    %v54 = vsel %vm53, %v47, 0.0
    %vm55 = vcmask 7168
    %v56 = vsel %vm55, %v54, 0.0
    %v57 = vrot.slane %v56, 4
    %v58 = vadd.f32 %v56, %v57
    %v59 = vrot.slane %v58, 2
    %v60 = vadd.f32 %v58, %v59
    %v61 = vrot.slane %v60, 1
    %v62 = vadd.f32 %v60, %v61
    %64 = vset.pattern.permute.xlu0 0
    %65 = vperm.xlu0 %64, %v62
    %v66 = vpop.permute.xlu0 %65
    %68 = vst [vmem:[#allocation2] sm:$0xff] %v66
    // Predicated region
    $region14: #{tpu_custom_call.1} parent=1 // pred_check
      _
    $region15: #{tpu_custom_call.1} parent=1 // pred_check_branch
      %70 = sbr.rel (0) target = $region17
    $region16: #{tpu_custom_call.1} parent=1 // pred_region
      %s72 = ssub.s32 128, 128
      %73 = vsyncadd [#allocation3], %s72
      %s75 = sshll.u32 [#allocation2], 4
      %s76 = int_to_ptr.vmem [resolvable:$true] %s75
      %78 = dma.vmem_to_hbm [thread:$0]  %s76, 128, %s3, [#allocation3]
    $region17: #{tpu_custom_call.1} parent=1 // pred_fallthru
      _
    // Predicated region
    $region18: #{tpu_custom_call.1} parent=1 // pred_check
      _
    $region19: #{tpu_custom_call.1} parent=1 // pred_check_branch
      %80 = sbr.rel (0) target = $region21
    $region20: #{tpu_custom_call.1} parent=1 // pred_region
      %81 = dma.done [#allocation3], 128
    $region21: #{tpu_custom_call.1} parent=1 // pred_fallthru
      _
    %82 = vsyncpa [#allocation3], 1

</llo_original>
